<compile_context>
chip_gen: v7x
topology: tpu7x:2x2x1
jax: 0.10.0
libtpu: 0.0.40
codegen_flags: <defaults>
</compile_context>

<pallas_src>
import jax
import jax.numpy as jnp
from jax.experimental import pallas as pl
from jax.experimental.pallas import tpu as pltpu


def _iou_partial_kernel(pred_ref, target_ref, out_ref):
    # pred_ref / target_ref: (1, TR, 128) blocks; out_ref: (1, 1, 1, 128).
    p = pred_ref[...].astype(jnp.float32)
    t = target_ref[...].astype(jnp.float32)

    sum_t = jnp.sum(t)
    sum_p = jnp.sum(p)
    sum_tp = jnp.sum(t * p)

    # Pack the three scalar partials into lanes 0..2 of a (1,128) row.
    lane = jax.lax.broadcasted_iota(jnp.int32, (1, 128), 1)
    row = jnp.where(
        lane == 0,
        sum_t,
        jnp.where(lane == 1, sum_p, jnp.where(lane == 2, sum_tp, 0.0)),
    )
    out_ref[...] = row[None, None]


def _sublane_step(dtype) -> int:
    """Native sublane packing for a dtype (8 for 4B, 16 for 2B, 32 for 1B)."""
    itemsize = jnp.dtype(dtype).itemsize
    return max(8, 32 // max(1, itemsize))


def _pick_tile_rows(nl, step, per_row_bytes, budget_bytes, prefer_multi):
    """Largest multiple-of-`step` divisor of `nl` whose combined per-step input
    block fits `budget_bytes`; prefer splits giving >= 2 tiles if requested."""
    cands = [
        tr
        for tr in range(step, nl + 1, step)
        if nl % tr == 0 and tr * per_row_bytes <= budget_bytes
    ]
    if not cands:
        # A single `step`-row slab already exceeds the budget (unreachable for
        # sane budgets: step * 128 * bytes is at most a few tens of KiB).
        return step
    if prefer_multi:
        multi = [tr for tr in cands if nl // tr >= 2]
        if multi:
            cands = multi
    return max(cands)


def iou_loss(pred, target):
    """pred, target: (B, C, H, W), same shape (dtypes may differ: f32, bf16,
    int8, bool are all fine -- the kernel accumulates in f32).
    Returns the scalar mean over the batch of (1 - IoU)."""
    assert pred.shape == target.shape, (pred.shape, target.shape)
    B = pred.shape[0]
    L = 1
    for d in pred.shape[1:]:
        L *= d

    ip = jnp.dtype(pred.dtype).itemsize
    it = jnp.dtype(target.dtype).itemsize
    step = max(_sublane_step(pred.dtype), _sublane_step(target.dtype))
    lane_unit = step * 128

    # Free reshape to a lane-dense flat layout; zero-pad only when needed
    # (zeros do not change sum_t / sum_p / sum_tp).
    pred_flat = pred.reshape(B, L)
    target_flat = target.reshape(B, L)
    L_pad = ((L + lane_unit - 1) // lane_unit) * lane_unit
    if L_pad != L:
        pad = L_pad - L
        pred_flat = jnp.pad(pred_flat, ((0, 0), (0, pad)))
        target_flat = jnp.pad(target_flat, ((0, 0), (0, pad)))
    NL = L_pad // 128
    pred_flat = pred_flat.reshape(B, NL, 128)
    target_flat = target_flat.reshape(B, NL, 128)

    # Combined (pred + target) bytes per 128-lane row; ~20 MiB/step combined
    # (=> ~40 MiB double-buffered, fits v7x's 64 MiB VMEM with headroom).
    per_row_bytes = 128 * (ip + it)
    budget_bytes = 20 << 20
    prefer_multi = (B % 2 == 1)  # keep both v7x TensorCores busy for odd B
    TR = _pick_tile_rows(NL, step, per_row_bytes, budget_bytes, prefer_multi)
    NT = NL // TR

    cost = pl.CostEstimate(
        flops=4 * B * L_pad,                      # 1 mul + 3 adds per element
        transcendentals=0,
        bytes_accessed=B * L_pad * (ip + it) + B * NT * 128 * 4,
    )

    partials = pl.pallas_call(
        _iou_partial_kernel,
        out_shape=jax.ShapeDtypeStruct((B, NT, 1, 128), jnp.float32),
        grid=(B, NT),
        in_specs=[
            pl.BlockSpec((1, TR, 128), lambda i, j: (i, j, 0)),
            pl.BlockSpec((1, TR, 128), lambda i, j: (i, j, 0)),
        ],
        out_specs=pl.BlockSpec((1, 1, 1, 128), lambda i, j: (i, j, 0, 0)),
        compiler_params=pltpu.CompilerParams(
            dimension_semantics=("parallel", "parallel"),
            vmem_limit_bytes=48 * 1024 * 1024,
        ),
        cost_estimate=cost,
    )(pred_flat, target_flat)

    # Tiny finalization in the surrounding graph.
    sums = jnp.sum(partials[:, :, 0, :3], axis=1)  # (B, 3)
    sum_t, sum_p, sum_tp = sums[:, 0], sums[:, 1], sums[:, 2]
    iou = sum_tp / (sum_t + sum_p - sum_tp)
    return jnp.mean(1.0 - iou)


def _iou_ref(pred, target):
    """Pure-JAX mirror of the PyTorch `_iou` for correctness checks."""
    b = pred.shape[0]
    total = 0.0
    for i in range(b):
        iand = jnp.sum(target[i] * pred[i])
        ior = jnp.sum(target[i]) + jnp.sum(pred[i]) - iand
        total = total + (1.0 - iand / ior)
    return total / b


if __name__ == "__main__":
    key = jax.random.PRNGKey(0)
    k1, k2, k3, k4 = jax.random.split(key, 4)

    # Test 1: aligned shape (C*H*W multiple of 128), f32 inputs.
    B, C, H, W = 2, 4, 16, 16
    pred = jax.random.uniform(k1, (B, C, H, W), dtype=jnp.float32)
    target = (jax.random.uniform(k2, (B, C, H, W)) > 0.5).astype(jnp.float32)
    out = jax.block_until_ready(iou_loss(pred, target))
    ref = _iou_ref(pred, target)
    assert jnp.allclose(out, ref, rtol=1e-5, atol=1e-6), (out, ref)

    # Test 2: awkward shape (C*H*W not a multiple of 128), odd batch.
    B2, C2, H2, W2 = 3, 1, 10, 14
    pred2 = jax.random.uniform(k3, (B2, C2, H2, W2), dtype=jnp.float32)
    target2 = (jax.random.uniform(k4, (B2, C2, H2, W2)) > 0.5).astype(jnp.float32)
    out2 = jax.block_until_ready(iou_loss(pred2, target2))
    ref2 = _iou_ref(pred2, target2)
    assert jnp.allclose(out2, ref2, rtol=1e-5, atol=1e-6), (out2, ref2)

    # Test 3: narrow-dtype contract (bf16 pred, int8 binary target mask) --
    # the recommended production path; looser tolerance (input quantization).
    pred3 = pred.astype(jnp.bfloat16)
    target3 = target.astype(jnp.int8)
    out3 = jax.block_until_ready(iou_loss(pred3, target3))
    ref3 = _iou_ref(pred3.astype(jnp.float32), target3.astype(jnp.float32))
    assert jnp.allclose(out3, ref3, rtol=2e-2, atol=2e-3), (out3, ref3)

    print("KERNEL_OK")
</pallas_src>

<mosaic_0001>
module attributes {stable_mosaic.version = 11 : i64} {
  func.func @_iou_partial_kernel(%arg0: i32, %arg1: i32, %arg2: memref<1x8x128xf32, #tpu.memory_space<vmem>>, %arg3: memref<1x8x128xf32, #tpu.memory_space<vmem>>, %arg4: memref<1x1x1x128xf32, #tpu.memory_space<vmem>>) attributes {dimension_semantics = [#tpu.dimension_semantics<parallel>, #tpu.dimension_semantics<parallel>], iteration_bounds = array<i64: 2, 1>, scalar_prefetch = 0 : i64, scratch_operands = 0 : i64, tpu.core_type = #tpu.core_type<tc>, window_params = [{transform_indices = @transform_0, window_bounds = array<i64: 1, 8, 128>}, {transform_indices = @transform_1, window_bounds = array<i64: 1, 8, 128>}, {transform_indices = @transform_2, window_bounds = array<i64: 1, 1, 1, 128>}]} {
    %c0 = arith.constant 0 : index
    %c0_0 = arith.constant 0 : index
    %c0_1 = arith.constant 0 : index
    %0 = vector.load %arg2[%c0, %c0_0, %c0_1] : memref<1x8x128xf32, #tpu.memory_space<vmem>>, vector<1x8x128xf32>
    %c0_2 = arith.constant 0 : index
    %c0_3 = arith.constant 0 : index
    %c0_4 = arith.constant 0 : index
    %1 = vector.load %arg3[%c0_2, %c0_3, %c0_4] : memref<1x8x128xf32, #tpu.memory_space<vmem>>, vector<1x8x128xf32>
    %2 = vector.shape_cast %1 : vector<1x8x128xf32> to vector<1x1x8x128xf32>
    %cst = arith.constant dense<0.000000e+00> : vector<1xf32>
    %3 = vector.multi_reduction <add>, %2, %cst [1, 2, 3] : vector<1x1x8x128xf32> to vector<1xf32>
    %4 = vector.shape_cast %3 : vector<1xf32> to vector<1x1x1x1xf32>
    %5 = vector.extract %4[0, 0, 0, 0] : f32 from vector<1x1x1x1xf32>
    %6 = vector.shape_cast %0 : vector<1x8x128xf32> to vector<1x1x8x128xf32>
    %cst_5 = arith.constant dense<0.000000e+00> : vector<1xf32>
    %7 = vector.multi_reduction <add>, %6, %cst_5 [1, 2, 3] : vector<1x1x8x128xf32> to vector<1xf32>
    %8 = vector.shape_cast %7 : vector<1xf32> to vector<1x1x1x1xf32>
    %9 = vector.extract %8[0, 0, 0, 0] : f32 from vector<1x1x1x1xf32>
    %10 = arith.mulf %1, %0 : vector<1x8x128xf32>
    %11 = vector.shape_cast %10 : vector<1x8x128xf32> to vector<1x1x8x128xf32>
    %cst_6 = arith.constant dense<0.000000e+00> : vector<1xf32>
    %12 = vector.multi_reduction <add>, %11, %cst_6 [1, 2, 3] : vector<1x1x8x128xf32> to vector<1xf32>
    %13 = vector.shape_cast %12 : vector<1xf32> to vector<1x1x1x1xf32>
    %14 = vector.extract %13[0, 0, 0, 0] : f32 from vector<1x1x1x1xf32>
    %15 = tpu.iota {dimensions = array<i32: 1>} : vector<1x128xi32>
    %c0_i32 = arith.constant 0 : i32
    %16 = vector.broadcast %c0_i32 : i32 to vector<1x128xi32>
    %17 = arith.cmpi eq, %15, %16 : vector<1x128xi32>
    %c1_i32 = arith.constant 1 : i32
    %18 = vector.broadcast %c1_i32 : i32 to vector<1x128xi32>
    %19 = arith.cmpi eq, %15, %18 : vector<1x128xi32>
    %c2_i32 = arith.constant 2 : i32
    %20 = vector.broadcast %c2_i32 : i32 to vector<1x128xi32>
    %21 = arith.cmpi eq, %15, %20 : vector<1x128xi32>
    %cst_7 = arith.constant 0.000000e+00 : f32
    %22 = vector.broadcast %14 : f32 to vector<1x128xf32>
    %23 = vector.broadcast %cst_7 : f32 to vector<1x128xf32>
    %24 = arith.select %21, %22, %23 : vector<1x128xi1>, vector<1x128xf32>
    %25 = vector.broadcast %9 : f32 to vector<1x128xf32>
    %26 = arith.select %19, %25, %24 : vector<1x128xi1>, vector<1x128xf32>
    %27 = vector.broadcast %5 : f32 to vector<1x128xf32>
    %28 = arith.select %17, %27, %26 : vector<1x128xi1>, vector<1x128xf32>
    %29 = vector.shape_cast %28 : vector<1x128xf32> to vector<1x1x1x128xf32>
    %c0_8 = arith.constant 0 : index
    %c0_9 = arith.constant 0 : index
    %c0_10 = arith.constant 0 : index
    %c0_11 = arith.constant 0 : index
    %30 = vector.load %arg4[%c0_8, %c0_9, %c0_10, %c0_11] : memref<1x1x1x128xf32, #tpu.memory_space<vmem>>, vector<1x1x1x128xf32>
    tpu.vector_store %arg4[%c0_8, %c0_9, %c0_10, %c0_11], %29 {strides = array<i32>} : memref<1x1x1x128xf32, #tpu.memory_space<vmem>>, vector<1x1x1x128xf32>,
    return
  }
  func.func @transform_0(%arg0: i32, %arg1: i32) -> (i32, i32, i32) {
    %c0_i32 = arith.constant 0 : i32
    %c0_i32_0 = arith.constant 0 : i32
    return %arg0, %arg1, %c0_i32 : i32, i32, i32
  }
  func.func @transform_1(%arg0: i32, %arg1: i32) -> (i32, i32, i32) {
    %c0_i32 = arith.constant 0 : i32
    %c0_i32_0 = arith.constant 0 : i32
    return %arg0, %arg1, %c0_i32 : i32, i32, i32
  }
  func.func @transform_2(%arg0: i32, %arg1: i32) -> (i32, i32, i32, i32) {
    %c0_i32 = arith.constant 0 : i32
    %c0_i32_0 = arith.constant 0 : i32
    %c0_i32_1 = arith.constant 0 : i32
    return %arg0, %arg1, %c0_i32, %c0_i32_0 : i32, i32, i32, i32
  }
}

</mosaic_0001>

<llo_original>
// kernel: tpu_custom_call.1
$region0: #{tpu_custom_call.1}
  #allocation0 [shape = 'u32[]', space=smem, size = 0x4, offset = 0x4, fixed_abs, tag = 'smem constant byte address 0x4 - core index']
  #allocation1 [shape = 'u32[144,128]{1,0:T(1,128)}', space=vmem, size = 0x12000, scoped, tag = 'internal scratch']
  %s0 = inlined_call_operand.hbm [shape: f32[2,8,128], index: 0, kind: input, shape index: {}]
  %s1 = inlined_call_operand.hbm [shape: f32[2,8,128], index: 1, kind: input, shape index: {}]
  %s2 = inlined_call_operand.hbm [shape: f32[2,1,1,128], index: 2, kind: output, shape index: {}]
  %s3 = sld [smem:[#allocation0]]
  $region49: #{tpu_custom_call.1} parent=0
    _
  %s5 = ssub.s32 1, %s3
  %s6 = scalar_select 0, %s5, %s3
  $region1: #{tpu_custom_call.1} parent=0
    #allocation2 [shape = 'u8[8192]{0}', space=vmem, size = 0x2000, scoped, tag = 'input window, operand 0']
    #allocation3 [shape = 's32[2]{0}', space=sflag, size = 0x8, scoped, tag = 'scoped memory for tpu_custom_call.1']
    #allocation4 [shape = 's32[2]{0}', space=sflag, size = 0x8, scoped, tag = 'scoped memory for tpu_custom_call.1']
    #allocation5 [shape = 'u8[8192]{0}', space=vmem, size = 0x2000, scoped, tag = 'input window, operand 1']
    #allocation6 [shape = 's32[2]{0}', space=sflag, size = 0x8, scoped, tag = 'scoped memory for tpu_custom_call.1']
    #allocation7 [shape = 'u8[1024]{0}', space=vmem, size = 0x400, scoped, tag = 'output window, operand 0']
    %7 = vsyncpa [#allocation3], 0
    %s8 = scalar_lea.sflag [#allocation3], 1
    %9 = vsyncpa %s8, 0
    %10 = vsyncpa [#allocation6], 0
    %s11 = scalar_lea.sflag [#allocation6], 1
    %12 = vsyncpa %s11, 0
    %13 = vsyncpa [#allocation4], 0
    %s14 = scalar_lea.sflag [#allocation4], 1
    %15 = vsyncpa %s14, 0
    loop: start=0, step=1, limit=4
    $region2: #{tpu_custom_call.1} parent=1 // loop_pre_header
      _
    $region3: #{tpu_custom_call.1} parent=1 // loop_header
      %s17 = sphi 0, %s21
      %p18 = scmp.ge.s32.totalorder %s17, 4
      %s24 = sphi 0, %s36
      %s25 = sphi 0, %s32
      %s26 = sphi 0, %s24
      %s27 = sphi 0, %s25
      %s28 = sphi 0, %s26
      %s29 = sphi 0, %s27
      %s41 = sphi 0, %s43
      %s44 = sphi 0, %s41
      %s45 = sphi 0, %s44
      %s61 = sphi 0, %s45
      %s69 = sphi 0, %s71
      %s72 = sphi 0, %s69
      %s73 = sphi 0, %s72
      %s89 = sphi 0, %s73
      %s97 = sphi 0, %s99
      %s100 = sphi 0, %s97
      %s101 = sphi 0, %s100
      %s117 = sphi 0, %s101
    $region4: #{tpu_custom_call.1} parent=1 // loop_header_branch
      %20 = sbr.rel (%p18) target = $region8
    $region5: #{tpu_custom_call.1} parent=1 // loop_body
      %s22 = ssub.s32 %s17, 1
      %s23 = ssub.s32 %s17, 2
      %s30 = sadd.s32 1, %s25
      %p31 = scmp.ge.s32.totalorder %s30, 1
      %s32 = scalar_select %p31, 0, %s30
      %s33 = sadd.s32 1, %s24
      %s34 = scalar_select %p31, %s33, %s24
      %p35 = scmp.ge.s32.totalorder %s34, 2
      %s36 = scalar_select %p35, 0, %s34
      %s37 = ssub.s32 %s24, %s36
      %s38 = ssub.s32 %s25, %s32
      %s39 = sor.u32 %s37, %s38
      %p40 = scmp.eq.s32.totalorder %s39, 0
      %s42 = sadd.s32 %s41, 1
      %s43 = scalar_select %p40, %s41, %s42
      %p46 = pneg %p40
      %p47 = scmp.eq.s32.totalorder %s17, 1
      %p48 = por %p46, %p47
      %p49 = scmp.ne.s32.totalorder %s41, %s44
      %p50 = scmp.eq.s32.totalorder %s17, 0
      %p51 = por %p49, %p50
      %p52 = scmp.ne.s32.totalorder %s41, %s44
      %p53 = scmp.eq.s32.totalorder %s22, 1
      %p54 = por %p52, %p53
      %p55 = scmp.ne.s32.totalorder %s44, %s45
      %p56 = scmp.eq.s32.totalorder %s22, 0
      %p57 = por %p55, %p56
      %p58 = scmp.ne.s32.totalorder %s44, %s45
      %p59 = scmp.eq.s32.totalorder %s23, 1
      %p60 = por %p58, %p59
      %p62 = scmp.ne.s32.totalorder %s45, %s61
      %p63 = scmp.eq.s32.totalorder %s23, 0
      %p64 = por %p62, %p63
      %s65 = ssub.s32 %s24, %s36
      %s66 = ssub.s32 %s25, %s32
      %s67 = sor.u32 %s65, %s66
      %p68 = scmp.eq.s32.totalorder %s67, 0
      %s70 = sadd.s32 %s69, 1
      %s71 = scalar_select %p68, %s69, %s70
      %p74 = pneg %p68
      %p75 = scmp.eq.s32.totalorder %s17, 1
      %p76 = por %p74, %p75
      %p77 = scmp.ne.s32.totalorder %s69, %s72
      %p78 = scmp.eq.s32.totalorder %s17, 0
      %p79 = por %p77, %p78
      %p80 = scmp.ne.s32.totalorder %s69, %s72
      %p81 = scmp.eq.s32.totalorder %s22, 1
      %p82 = por %p80, %p81
      %p83 = scmp.ne.s32.totalorder %s72, %s73
      %p84 = scmp.eq.s32.totalorder %s22, 0
      %p85 = por %p83, %p84
      %p86 = scmp.ne.s32.totalorder %s72, %s73
      %p87 = scmp.eq.s32.totalorder %s23, 1
      %p88 = por %p86, %p87
      %p90 = scmp.ne.s32.totalorder %s73, %s89
      %p91 = scmp.eq.s32.totalorder %s23, 0
      %p92 = por %p90, %p91
      %s93 = ssub.s32 %s24, %s36
      %s94 = ssub.s32 %s25, %s32
      %s95 = sor.u32 %s93, %s94
      %p96 = scmp.eq.s32.totalorder %s95, 0
      %s98 = sadd.s32 %s97, 1
      %s99 = scalar_select %p96, %s97, %s98
      %p102 = pneg %p96
      %p103 = scmp.eq.s32.totalorder %s17, 1
      %p104 = por %p102, %p103
      %p105 = scmp.ne.s32.totalorder %s97, %s100
      %p106 = scmp.eq.s32.totalorder %s17, 0
      %p107 = por %p105, %p106
      %p108 = scmp.ne.s32.totalorder %s97, %s100
      %p109 = scmp.eq.s32.totalorder %s22, 1
      %p110 = por %p108, %p109
      %p111 = scmp.ne.s32.totalorder %s100, %s101
      %p112 = scmp.eq.s32.totalorder %s22, 0
      %p113 = por %p111, %p112
      %p114 = scmp.ne.s32.totalorder %s100, %s101
      %p115 = scmp.eq.s32.totalorder %s23, 1
      %p116 = por %p114, %p115
      %p118 = scmp.ne.s32.totalorder %s101, %s117
      %p119 = scmp.eq.s32.totalorder %s23, 0
      %p120 = por %p118, %p119
      %p121 = scmp.le.s32.totalorder 1, %s17
      %p122 = scmp.lt.s32.totalorder %s17, 3
      %p123 = pnand %p121, %p122
      %p124 = pneg %p123
      // Predicated region
      $region9: #{tpu_custom_call.1} parent=5 // pred_check
        _
      $region10: #{tpu_custom_call.1} parent=5 // pred_check_branch
        %126 = sbr.rel (%p123) target = $region12
      $region11: #{tpu_custom_call.1} parent=5 // pred_region
        %s127 = ssub.s32 %s17, 1
      $region12: #{tpu_custom_call.1} parent=5 // pred_fallthru
        _
      %p128 = scmp.lt.s32.totalorder %s17, 2
      // Predicated region
      $region13: #{tpu_custom_call.1} parent=5 // pred_check
        %p129 = pneg %p128
      $region14: #{tpu_custom_call.1} parent=5 // pred_check_branch
        %131 = sbr.rel (%p129) target = $region16
      $region15: #{tpu_custom_call.1} parent=5 // pred_region
        // Predicated region
        $region17: #{tpu_custom_call.1} parent=15 // pred_check
          %p132 = pneg %p51
        $region18: #{tpu_custom_call.1} parent=15 // pred_check_branch
          %134 = sbr.rel (%p132) target = $region20
        $region19: #{tpu_custom_call.1} parent=15 // pred_region
          %s135 = sand.u32 %s41, 1
          %s136 = scalar_lea.sflag [#allocation3], %s135
          %s137 = sand.u32 %s41, 1
          %s138 = smul.addr %s137, 8
          %s139 = scalar_lea.vmem [#allocation2], %s138
          %s141 = ssub.s32 128, 128
          %142 = vsyncadd %s136, %s141
          %s143 = sadd.s32 %s25, %s24
          %s144 = smul.addr %s143, 128
          %s145 = scalar_lea.hbm %s0, %s144
          %s147 = sshll.u32 %s139, 4
          %s148 = int_to_ptr.vmem [resolvable:$true] %s147
          %150 = dma.hbm_to_vmem [thread:$0]  %s145, 128, %s148, %s136
        $region20: #{tpu_custom_call.1} parent=15 // pred_fallthru
          _
        // Predicated region
        $region21: #{tpu_custom_call.1} parent=15 // pred_check
          %p151 = pneg %p79
        $region22: #{tpu_custom_call.1} parent=15 // pred_check_branch
          %153 = sbr.rel (%p151) target = $region24
        $region23: #{tpu_custom_call.1} parent=15 // pred_region
          %s154 = sand.u32 %s69, 1
          %s155 = scalar_lea.sflag [#allocation6], %s154
          %s156 = sand.u32 %s69, 1
          %s157 = smul.addr %s156, 8
          %s158 = scalar_lea.vmem [#allocation5], %s157
          %s160 = ssub.s32 128, 128
          %161 = vsyncadd %s155, %s160
          %s162 = sadd.s32 %s25, %s24
          %s163 = smul.addr %s162, 128
          %s164 = scalar_lea.hbm %s1, %s163
          %s166 = sshll.u32 %s158, 4
          %s167 = int_to_ptr.vmem [resolvable:$true] %s166
          %169 = dma.hbm_to_vmem [thread:$0]  %s164, 128, %s167, %s155
        $region24: #{tpu_custom_call.1} parent=15 // pred_fallthru
          _
      $region16: #{tpu_custom_call.1} parent=5 // pred_fallthru
        _
      %p170 = scmp.le.s32.totalorder 1, %s17
      %p171 = scmp.lt.s32.totalorder %s17, 3
      %p172 = pnand %p170, %p171
      %p173 = pneg %p172
      // Predicated region
      $region25: #{tpu_custom_call.1} parent=5 // pred_check
        _
      $region26: #{tpu_custom_call.1} parent=5 // pred_check_branch
        %175 = sbr.rel (%p172) target = $region28
      $region27: #{tpu_custom_call.1} parent=5 // pred_region
        %s176 = ssub.s32 %s17, 1
        %s177 = sand.u32 %s44, 1
        %s178 = scalar_lea.sflag [#allocation3], %s177
        %s179 = sand.u32 %s44, 1
        %s180 = smul.addr %s179, 8
        %s181 = scalar_lea.vmem [#allocation2], %s180
        // Predicated region
        $region29: #{tpu_custom_call.1} parent=27 // pred_check
          %p182 = pneg %p57
        $region30: #{tpu_custom_call.1} parent=27 // pred_check_branch
          %184 = sbr.rel (%p182) target = $region32
        $region31: #{tpu_custom_call.1} parent=27 // pred_region
          %185 = dma.done %s178, 128
        $region32: #{tpu_custom_call.1} parent=27 // pred_fallthru
          _
        %s186 = sand.u32 %s72, 1
        %s187 = scalar_lea.sflag [#allocation6], %s186
        %s188 = sand.u32 %s72, 1
        %s189 = smul.addr %s188, 8
        %s190 = scalar_lea.vmem [#allocation5], %s189
        // Predicated region
        $region33: #{tpu_custom_call.1} parent=27 // pred_check
          %p191 = pneg %p85
        $region34: #{tpu_custom_call.1} parent=27 // pred_check_branch
          %193 = sbr.rel (%p191) target = $region36
        $region35: #{tpu_custom_call.1} parent=27 // pred_region
          %194 = dma.done %s187, 128
        $region36: #{tpu_custom_call.1} parent=27 // pred_fallthru
          _
        %s195 = sand.u32 %s44, 1
        %s196 = scalar_lea.sflag [#allocation3], %s195
        %s197 = sand.u32 %s44, 1
        %s198 = smul.addr %s197, 8
        %s199 = scalar_lea.vmem [#allocation2], %s198
        %p200 = pneg %p57
        %p201 = pneg %p54
        %s202 = sand.u32 %s72, 1
        %s203 = scalar_lea.sflag [#allocation6], %s202
        %s204 = sand.u32 %s72, 1
        %s205 = smul.addr %s204, 8
        %s206 = scalar_lea.vmem [#allocation5], %s205
        %p207 = pneg %p85
        %p208 = pneg %p82
        %p209 = pneg %p113
        %p210 = pneg %p110
        %s211 = sand.u32 %s100, 1
        %s212 = scalar_lea.sflag [#allocation4], %s211
        %s213 = sand.u32 %s100, 1
        %s214 = scalar_lea.vmem [#allocation7], %s213
        %v215 = vld [vmem:[%s181] sm:$0xff]
        %v216 = vld [vmem:[%s190] sm:$0xff]
        %217 = vadd.xlane.f32.xlu0 %v216
        %v218 = vpop.xlane.xlu0 %217
        %v219 = vrot.slane %v218, 4
        %v220 = vadd.f32 %v218, %v219
        %v221 = vrot.slane %v220, 2
        %v222 = vadd.f32 %v220, %v221
        %v223 = vrot.slane %v222, 1
        %v224 = vadd.f32 %v222, %v223
        %s225 = vtos %v224
        %226 = vadd.xlane.f32.xlu0 %v215
        %v227 = vpop.xlane.xlu0 %226
        %v228 = vrot.slane %v227, 4
        %v229 = vadd.f32 %v227, %v228
        %v230 = vrot.slane %v229, 2
        %v231 = vadd.f32 %v229, %v230
        %v232 = vrot.slane %v231, 1
        %v233 = vadd.f32 %v231, %v232
        %s234 = vtos %v233
        %v235 = vmul.f32 %v216, %v215
        %236 = vadd.xlane.f32.xlu0 %v235
        %v237 = vpop.xlane.xlu0 %236
        %v238 = vrot.slane %v237, 4
        %v239 = vadd.f32 %v237, %v238
        %v240 = vrot.slane %v239, 2
        %v241 = vadd.f32 %v239, %v240
        %v242 = vrot.slane %v241, 1
        %v243 = vadd.f32 %v241, %v242
        %s244 = vtos %v243
        %v245 = vlaneseq
        %v246 = vand.u32 %v245, 127
        %vm247 = vcmp.eq.s32.totalorder %v246, 0
        %vm248 = vcmp.eq.s32.totalorder %v246, 1
        %vm249 = vcmp.eq.s32.totalorder %v246, 2
        %v250 = vstv %s244
        %v251 = vsel %vm249, %v250, 0.0
        %v252 = vstv %s234
        %v253 = vsel %vm248, %v252, %v251
        %v254 = vstv %s225
        %v255 = vsel %vm247, %v254, %v253
        %256 = vst [vmem:[%s214] sm:$0x1] %v255
        %s257 = sand.u32 %s100, 1
        %s258 = scalar_lea.sflag [#allocation4], %s257
        %s259 = sand.u32 %s100, 1
        %s260 = scalar_lea.vmem [#allocation7], %s259
        // Predicated region
        $region37: #{tpu_custom_call.1} parent=27 // pred_check
          %p261 = pneg %p110
        $region38: #{tpu_custom_call.1} parent=27 // pred_check_branch
          %263 = sbr.rel (%p261) target = $region40
        $region39: #{tpu_custom_call.1} parent=27 // pred_region
          %s265 = ssub.s32 16, 16
          %266 = vsyncadd %s258, %s265
          %s267 = sadd.s32 %s27, %s26
          %s268 = smul.addr %s267, 16
          %s269 = scalar_lea.hbm %s2, %s268
          %s271 = sshll.u32 %s260, 4
          %s272 = int_to_ptr.vmem [resolvable:$true] %s271
          %274 = dma.vmem_to_hbm [thread:$0]  %s272, 16, %s269, %s258
        $region40: #{tpu_custom_call.1} parent=27 // pred_fallthru
          _
      $region28: #{tpu_custom_call.1} parent=5 // pred_fallthru
        _
      %p275 = scmp.le.s32.totalorder 2, %s17
      // Predicated region
      $region41: #{tpu_custom_call.1} parent=5 // pred_check
        %p276 = pneg %p275
      $region42: #{tpu_custom_call.1} parent=5 // pred_check_branch
        %278 = sbr.rel (%p276) target = $region44
      $region43: #{tpu_custom_call.1} parent=5 // pred_region
        %s279 = ssub.s32 %s17, 2
        // Predicated region
        $region45: #{tpu_custom_call.1} parent=43 // pred_check
          %p280 = pneg %p116
        $region46: #{tpu_custom_call.1} parent=43 // pred_check_branch
          %282 = sbr.rel (%p280) target = $region48
        $region47: #{tpu_custom_call.1} parent=43 // pred_region
          %s283 = sand.u32 %s101, 1
          %s284 = scalar_lea.sflag [#allocation4], %s283
          %s285 = sand.u32 %s101, 1
          %s286 = scalar_lea.vmem [#allocation7], %s285
          %287 = dma.done %s284, 16
        $region48: #{tpu_custom_call.1} parent=43 // pred_fallthru
          _
      $region44: #{tpu_custom_call.1} parent=5 // pred_fallthru
        _
    $region6: #{tpu_custom_call.1} parent=1 // loop_footer
      %s21 = sadd.s32 1, %s17
    $region7: #{tpu_custom_call.1} parent=1 // loop_footer_branch
      %16 = sbr.rel target = $region3
    $region8: #{tpu_custom_call.1} parent=1 // loop_exit
      _
    %288 = vsyncpa [#allocation3], 1
    %s289 = scalar_lea.sflag [#allocation3], 1
    %290 = vsyncpa %s289, 1
    %291 = vsyncpa [#allocation6], 1
    %s292 = scalar_lea.sflag [#allocation6], 1
    %293 = vsyncpa %s292, 1
    %294 = vsyncpa [#allocation4], 1
    %s295 = scalar_lea.sflag [#allocation4], 1
    %296 = vsyncpa %s295, 1

</llo_original>
